<compile_context>
chip_gen: v7x
topology: tpu7x:2x2x1
jax: 0.10.0
libtpu: 0.0.40
codegen_flags: <defaults>
</compile_context>

<pallas_src>
import jax
import jax.numpy as jnp
from jax.experimental import pallas as pl
from jax.experimental.pallas import tpu as pltpu

# Model hyper-parameters (small shapes consistent with the module's forward).
H = 16
W = 16
NUM_CLASSES = 6
HIDDEN_DIM = 128
NUM_LAYERS = 4
IN_DIM = 3 * H * W          # 768, a multiple of 128 (lane-aligned)
OUT_PAD = 8                 # head padded to 8 columns (sublane-aligned, tiny HBM writes)
MAX_TB = 2048               # max batch-tile rows (f32 x tile: 2048*768*4 = 6 MiB/buffer)


def _round_up(x, m):
    return ((x + m - 1) // m) * m


def _choose_tb(b):
    """Batch tile: multiple of 8, capped by MAX_TB; >=2 grid steps when the
    batch spans more than one minimal tile (so v7x's 2 TCs both get work)."""
    tb = min(MAX_TB, _round_up(b, 8))
    if b > 8:
        tb = min(tb, _round_up(pl.cdiv(b, 2), 8))
    return tb


def mlp_residual_kernel(x_ref, w_in_ref, b_in_ref,
                        w_hid_ref, b_hid_ref,
                        w_out_ref, b_out_ref,
                        o_ref):
    # x_ref:     (TB, IN_DIM) f32   (streamed; cast to bf16 here, under the DMA)
    # w_in_ref:  (IN_DIM, HIDDEN_DIM) bf16,  b_in_ref:  (1, HIDDEN_DIM) f32
    # w_hid_ref: (NUM_LAYERS, HIDDEN_DIM, HIDDEN_DIM) bf16
    # b_hid_ref: (NUM_LAYERS, 1, HIDDEN_DIM) f32
    # w_out_ref: (HIDDEN_DIM, OUT_PAD) bf16, b_out_ref: (1, OUT_PAD) f32
    # o_ref:     (TB, OUT_PAD) f32
    x = x_ref[...].astype(jnp.bfloat16)

    # input layer + ReLU (bf16 MXU matmul, f32 accumulation / elementwise)
    h = jnp.dot(x, w_in_ref[...], preferred_element_type=jnp.float32)
    h = jnp.maximum(h + b_in_ref[...], 0.0)

    # residual hidden layers: h = relu(h @ W + b) + h
    for l in range(NUM_LAYERS):  # static unroll (NUM_LAYERS small & fixed)
        residual = h
        z = jnp.dot(h.astype(jnp.bfloat16), w_hid_ref[l],
                    preferred_element_type=jnp.float32)
        h = jnp.maximum(z + b_hid_ref[l], 0.0) + residual

    # output layer (no activation), padded to OUT_PAD columns
    out = jnp.dot(h.astype(jnp.bfloat16), w_out_ref[...],
                  preferred_element_type=jnp.float32)
    o_ref[...] = (out + b_out_ref[...]).astype(o_ref.dtype)


def init_params(key):
    """Deterministic synthetic parameters (shapes match the torch module)."""
    ks = jax.random.split(key, 6)
    scale_in = 1.0 / jnp.sqrt(IN_DIM)
    scale_h = 1.0 / jnp.sqrt(HIDDEN_DIM)
    w_in = jax.random.uniform(ks[0], (IN_DIM, HIDDEN_DIM), jnp.float32,
                              -scale_in, scale_in)
    b_in = jax.random.uniform(ks[1], (1, HIDDEN_DIM), jnp.float32,
                              -scale_in, scale_in)
    w_hid = jax.random.uniform(ks[2], (NUM_LAYERS, HIDDEN_DIM, HIDDEN_DIM),
                               jnp.float32, -scale_h, scale_h)
    b_hid = jax.random.uniform(ks[3], (NUM_LAYERS, 1, HIDDEN_DIM),
                               jnp.float32, -scale_h, scale_h)
    w_out = jax.random.uniform(ks[4], (HIDDEN_DIM, NUM_CLASSES), jnp.float32,
                               -scale_h, scale_h)
    b_out = jax.random.uniform(ks[5], (1, NUM_CLASSES), jnp.float32,
                               -scale_h, scale_h)
    return w_in, b_in, w_hid, b_hid, w_out, b_out


def mlp_classifier_deep_residual(x_img, params):
    """x_img: (B, 3, H, W) float32 -> (B, NUM_CLASSES) float32 logits."""
    w_in, b_in, w_hid, b_hid, w_out, b_out = params
    b = x_img.shape[0]

    # Glue: flatten NCHW exactly like torch.nn.Flatten.  Stays f32 (no extra
    # HBM cast pass); the kernel casts to bf16 on the fly.
    x = x_img.reshape(b, -1)

    tb = _choose_tb(b)
    grid = (pl.cdiv(b, tb),)   # partial last block handled by Pallas; rows independent

    # bf16 weights; head zero-padded to OUT_PAD columns.
    w_in_b = w_in.astype(jnp.bfloat16)
    w_hid_b = w_hid.astype(jnp.bfloat16)
    w_out_p = jnp.zeros((HIDDEN_DIM, OUT_PAD), jnp.bfloat16)
    w_out_p = w_out_p.at[:, :NUM_CLASSES].set(w_out.astype(jnp.bfloat16))
    b_out_p = jnp.zeros((1, OUT_PAD), jnp.float32)
    b_out_p = b_out_p.at[:, :NUM_CLASSES].set(b_out)

    flops = b * (2 * IN_DIM * HIDDEN_DIM
                 + NUM_LAYERS * 2 * HIDDEN_DIM * HIDDEN_DIM
                 + 2 * HIDDEN_DIM * OUT_PAD)
    bytes_accessed = (x.size * 4 + w_in_b.size * 2 + w_hid_b.size * 2
                      + w_out_p.size * 2 + b_in.size * 4 + b_hid.size * 4
                      + b_out_p.size * 4 + b * OUT_PAD * 4)

    # Weights/biases: constant block index -> VMEM-resident, DMA'd once.
    const = lambda shape: pl.BlockSpec(shape, lambda i: (0,) * len(shape))

    out = pl.pallas_call(
        mlp_residual_kernel,
        grid=grid,
        in_specs=[
            pl.BlockSpec((tb, IN_DIM), lambda i: (i, 0)),   # streamed f32 x
            const(w_in_b.shape),
            const(b_in.shape),
            const(w_hid_b.shape),
            const(b_hid.shape),
            const(w_out_p.shape),
            const(b_out_p.shape),
        ],
        out_specs=pl.BlockSpec((tb, OUT_PAD), lambda i: (i, 0)),
        out_shape=jax.ShapeDtypeStruct((b, OUT_PAD), jnp.float32),
        compiler_params=pltpu.CompilerParams(
            dimension_semantics=("parallel",),           # megacore on v7x
            vmem_limit_bytes=40 * 1024 * 1024),          # ~13 MiB used; safe under v7x 64 MiB
        cost_estimate=pl.CostEstimate(flops=flops, transcendentals=0,
                                      bytes_accessed=bytes_accessed),
    )(x, w_in_b, b_in, w_hid_b, b_hid, w_out_p, b_out_p)

    return out[:, :NUM_CLASSES]


def reference_forward(x_img, params):
    """Pure-JAX reference mirroring the kernel math (bf16 matmuls, f32 acc)."""
    w_in, b_in, w_hid, b_hid, w_out, b_out = params
    b = x_img.shape[0]
    x = x_img.reshape(b, -1).astype(jnp.bfloat16)
    h = jnp.dot(x, w_in.astype(jnp.bfloat16),
                preferred_element_type=jnp.float32)
    h = jnp.maximum(h + b_in, 0.0)
    for l in range(NUM_LAYERS):
        residual = h
        z = jnp.dot(h.astype(jnp.bfloat16), w_hid[l].astype(jnp.bfloat16),
                    preferred_element_type=jnp.float32)
        h = jnp.maximum(z + b_hid[l], 0.0) + residual
    out = jnp.dot(h.astype(jnp.bfloat16), w_out.astype(jnp.bfloat16),
                  preferred_element_type=jnp.float32)
    return out + b_out


if __name__ == "__main__":
    key = jax.random.PRNGKey(0)
    k_param, k_x = jax.random.split(key)
    params = init_params(k_param)

    batch = 2
    x_img = jax.random.normal(k_x, (batch, 3, H, W), jnp.float32)

    out = mlp_classifier_deep_residual(x_img, params)
    out = jax.block_until_ready(out)

    ref = reference_forward(x_img, params)
    assert out.shape == (batch, NUM_CLASSES)
    assert jnp.allclose(out, ref, atol=2e-3, rtol=2e-3), (
        f"max abs diff {jnp.max(jnp.abs(out - ref))}")

    print("KERNEL_OK")
</pallas_src>

<mosaic_0001>
module attributes {stable_mosaic.version = 11 : i64} {
  func.func @mlp_residual_kernel(%arg0: i32, %arg1: memref<8x768xf32, #tpu.memory_space<vmem>>, %arg2: memref<768x128xbf16, #tpu.memory_space<vmem>>, %arg3: memref<1x128xf32, #tpu.memory_space<vmem>>, %arg4: memref<4x128x128xbf16, #tpu.memory_space<vmem>>, %arg5: memref<4x1x128xf32, #tpu.memory_space<vmem>>, %arg6: memref<128x8xbf16, #tpu.memory_space<vmem>>, %arg7: memref<1x8xf32, #tpu.memory_space<vmem>>, %arg8: memref<8x8xf32, #tpu.memory_space<vmem>>) attributes {dimension_semantics = [#tpu.dimension_semantics<parallel>], iteration_bounds = array<i64: 1>, scalar_prefetch = 0 : i64, scratch_operands = 0 : i64, tpu.core_type = #tpu.core_type<tc>, window_params = [{transform_indices = @transform_0, window_bounds = array<i64: 8, 768>}, {pipeline_mode = #tpu.pipeline_mode<synchronous>, transform_indices = @transform_1, window_bounds = array<i64: 768, 128>}, {pipeline_mode = #tpu.pipeline_mode<synchronous>, transform_indices = @transform_2, window_bounds = array<i64: 1, 128>}, {pipeline_mode = #tpu.pipeline_mode<synchronous>, transform_indices = @transform_3, window_bounds = array<i64: 4, 128, 128>}, {pipeline_mode = #tpu.pipeline_mode<synchronous>, transform_indices = @transform_4, window_bounds = array<i64: 4, 1, 128>}, {pipeline_mode = #tpu.pipeline_mode<synchronous>, transform_indices = @transform_5, window_bounds = array<i64: 128, 8>}, {pipeline_mode = #tpu.pipeline_mode<synchronous>, transform_indices = @transform_6, window_bounds = array<i64: 1, 8>}, {transform_indices = @transform_7, window_bounds = array<i64: 8, 8>}]} {
    %c0 = arith.constant 0 : index
    %c0_0 = arith.constant 0 : index
    %0 = vector.load %arg1[%c0, %c0_0] : memref<8x768xf32, #tpu.memory_space<vmem>>, vector<8x768xf32>
    %1 = arith.truncf %0 : vector<8x768xf32> to vector<8x768xbf16>
    %c0_1 = arith.constant 0 : index
    %c0_2 = arith.constant 0 : index
    %2 = vector.load %arg2[%c0_1, %c0_2] : memref<768x128xbf16, #tpu.memory_space<vmem>>, vector<768x128xbf16>
    %cst = arith.constant dense<0.000000e+00> : vector<8x128xf32>
    %3 = tpu.matmul %1, %2, %cst {dimension_numbers = #tpu.dot_dimension_numbers<[1], [0], [0], [1], [0, 0, 1, 1], [], []>} : vector<8x768xbf16>, vector<768x128xbf16>, vector<8x128xf32> -> vector<8x128xf32>
    %c0_3 = arith.constant 0 : index
    %c0_4 = arith.constant 0 : index
    %4 = vector.load %arg3[%c0_3, %c0_4] : memref<1x128xf32, #tpu.memory_space<vmem>>, vector<1x128xf32>
    %5 = vector.broadcast %4 : vector<1x128xf32> to vector<8x128xf32>
    %6 = arith.addf %3, %5 : vector<8x128xf32>
    %cst_5 = arith.constant 0.000000e+00 : f32
    %7 = vector.broadcast %cst_5 : f32 to vector<8x128xf32>
    %8 = arith.maximumf %6, %7 : vector<8x128xf32>
    %9 = arith.truncf %8 : vector<8x128xf32> to vector<8x128xbf16>
    %c0_6 = arith.constant 0 : index
    %c0_7 = arith.constant 0 : index
    %c0_8 = arith.constant 0 : index
    %10 = vector.load %arg4[%c0_6, %c0_7, %c0_8] : memref<4x128x128xbf16, #tpu.memory_space<vmem>>, vector<1x128x128xbf16>
    %11 = vector.shape_cast %10 : vector<1x128x128xbf16> to vector<128x128xbf16>
    %cst_9 = arith.constant dense<0.000000e+00> : vector<8x128xf32>
    %12 = tpu.matmul %9, %11, %cst_9 {dimension_numbers = #tpu.dot_dimension_numbers<[1], [0], [0], [1], [0, 0, 1, 1], [], []>} : vector<8x128xbf16>, vector<128x128xbf16>, vector<8x128xf32> -> vector<8x128xf32>
    %c0_10 = arith.constant 0 : index
    %c0_11 = arith.constant 0 : index
    %c0_12 = arith.constant 0 : index
    %13 = vector.load %arg5[%c0_10, %c0_11, %c0_12] : memref<4x1x128xf32, #tpu.memory_space<vmem>>, vector<1x1x128xf32>
    %14 = vector.shape_cast %13 : vector<1x1x128xf32> to vector<1x128xf32>
    %15 = vector.broadcast %14 : vector<1x128xf32> to vector<8x128xf32>
    %16 = arith.addf %12, %15 : vector<8x128xf32>
    %cst_13 = arith.constant 0.000000e+00 : f32
    %17 = vector.broadcast %cst_13 : f32 to vector<8x128xf32>
    %18 = arith.maximumf %16, %17 : vector<8x128xf32>
    %19 = arith.addf %18, %8 : vector<8x128xf32>
    %20 = arith.truncf %19 : vector<8x128xf32> to vector<8x128xbf16>
    %c1 = arith.constant 1 : index
    %c0_14 = arith.constant 0 : index
    %c0_15 = arith.constant 0 : index
    %21 = vector.load %arg4[%c1, %c0_14, %c0_15] : memref<4x128x128xbf16, #tpu.memory_space<vmem>>, vector<1x128x128xbf16>
    %22 = vector.shape_cast %21 : vector<1x128x128xbf16> to vector<128x128xbf16>
    %cst_16 = arith.constant dense<0.000000e+00> : vector<8x128xf32>
    %23 = tpu.matmul %20, %22, %cst_16 {dimension_numbers = #tpu.dot_dimension_numbers<[1], [0], [0], [1], [0, 0, 1, 1], [], []>} : vector<8x128xbf16>, vector<128x128xbf16>, vector<8x128xf32> -> vector<8x128xf32>
    %c1_17 = arith.constant 1 : index
    %c0_18 = arith.constant 0 : index
    %c0_19 = arith.constant 0 : index
    %24 = vector.load %arg5[%c1_17, %c0_18, %c0_19] : memref<4x1x128xf32, #tpu.memory_space<vmem>>, vector<1x1x128xf32>
    %25 = vector.shape_cast %24 : vector<1x1x128xf32> to vector<1x128xf32>
    %26 = vector.broadcast %25 : vector<1x128xf32> to vector<8x128xf32>
    %27 = arith.addf %23, %26 : vector<8x128xf32>
    %cst_20 = arith.constant 0.000000e+00 : f32
    %28 = vector.broadcast %cst_20 : f32 to vector<8x128xf32>
    %29 = arith.maximumf %27, %28 : vector<8x128xf32>
    %30 = arith.addf %29, %19 : vector<8x128xf32>
    %31 = arith.truncf %30 : vector<8x128xf32> to vector<8x128xbf16>
    %c2 = arith.constant 2 : index
    %c0_21 = arith.constant 0 : index
    %c0_22 = arith.constant 0 : index
    %32 = vector.load %arg4[%c2, %c0_21, %c0_22] : memref<4x128x128xbf16, #tpu.memory_space<vmem>>, vector<1x128x128xbf16>
    %33 = vector.shape_cast %32 : vector<1x128x128xbf16> to vector<128x128xbf16>
    %cst_23 = arith.constant dense<0.000000e+00> : vector<8x128xf32>
    %34 = tpu.matmul %31, %33, %cst_23 {dimension_numbers = #tpu.dot_dimension_numbers<[1], [0], [0], [1], [0, 0, 1, 1], [], []>} : vector<8x128xbf16>, vector<128x128xbf16>, vector<8x128xf32> -> vector<8x128xf32>
    %c2_24 = arith.constant 2 : index
    %c0_25 = arith.constant 0 : index
    %c0_26 = arith.constant 0 : index
    %35 = vector.load %arg5[%c2_24, %c0_25, %c0_26] : memref<4x1x128xf32, #tpu.memory_space<vmem>>, vector<1x1x128xf32>
    %36 = vector.shape_cast %35 : vector<1x1x128xf32> to vector<1x128xf32>
    %37 = vector.broadcast %36 : vector<1x128xf32> to vector<8x128xf32>
    %38 = arith.addf %34, %37 : vector<8x128xf32>
    %cst_27 = arith.constant 0.000000e+00 : f32
    %39 = vector.broadcast %cst_27 : f32 to vector<8x128xf32>
    %40 = arith.maximumf %38, %39 : vector<8x128xf32>
    %41 = arith.addf %40, %30 : vector<8x128xf32>
    %42 = arith.truncf %41 : vector<8x128xf32> to vector<8x128xbf16>
    %c3 = arith.constant 3 : index
    %c0_28 = arith.constant 0 : index
    %c0_29 = arith.constant 0 : index
    %43 = vector.load %arg4[%c3, %c0_28, %c0_29] : memref<4x128x128xbf16, #tpu.memory_space<vmem>>, vector<1x128x128xbf16>
    %44 = vector.shape_cast %43 : vector<1x128x128xbf16> to vector<128x128xbf16>
    %cst_30 = arith.constant dense<0.000000e+00> : vector<8x128xf32>
    %45 = tpu.matmul %42, %44, %cst_30 {dimension_numbers = #tpu.dot_dimension_numbers<[1], [0], [0], [1], [0, 0, 1, 1], [], []>} : vector<8x128xbf16>, vector<128x128xbf16>, vector<8x128xf32> -> vector<8x128xf32>
    %c3_31 = arith.constant 3 : index
    %c0_32 = arith.constant 0 : index
    %c0_33 = arith.constant 0 : index
    %46 = vector.load %arg5[%c3_31, %c0_32, %c0_33] : memref<4x1x128xf32, #tpu.memory_space<vmem>>, vector<1x1x128xf32>
    %47 = vector.shape_cast %46 : vector<1x1x128xf32> to vector<1x128xf32>
    %48 = vector.broadcast %47 : vector<1x128xf32> to vector<8x128xf32>
    %49 = arith.addf %45, %48 : vector<8x128xf32>
    %cst_34 = arith.constant 0.000000e+00 : f32
    %50 = vector.broadcast %cst_34 : f32 to vector<8x128xf32>
    %51 = arith.maximumf %49, %50 : vector<8x128xf32>
    %52 = arith.addf %51, %41 : vector<8x128xf32>
    %53 = arith.truncf %52 : vector<8x128xf32> to vector<8x128xbf16>
    %c0_35 = arith.constant 0 : index
    %c0_36 = arith.constant 0 : index
    %54 = vector.load %arg6[%c0_35, %c0_36] : memref<128x8xbf16, #tpu.memory_space<vmem>>, vector<128x8xbf16>
    %cst_37 = arith.constant dense<0.000000e+00> : vector<8x8xf32>
    %55 = tpu.matmul %53, %54, %cst_37 {dimension_numbers = #tpu.dot_dimension_numbers<[1], [0], [0], [1], [0, 0, 1, 1], [], []>} : vector<8x128xbf16>, vector<128x8xbf16>, vector<8x8xf32> -> vector<8x8xf32>
    %c0_38 = arith.constant 0 : index
    %c0_39 = arith.constant 0 : index
    %56 = vector.load %arg7[%c0_38, %c0_39] : memref<1x8xf32, #tpu.memory_space<vmem>>, vector<1x8xf32>
    %57 = vector.broadcast %56 : vector<1x8xf32> to vector<8x8xf32>
    %58 = arith.addf %55, %57 : vector<8x8xf32>
    %c0_40 = arith.constant 0 : index
    %c0_41 = arith.constant 0 : index
    %59 = vector.load %arg8[%c0_40, %c0_41] : memref<8x8xf32, #tpu.memory_space<vmem>>, vector<8x8xf32>
    tpu.vector_store %arg8[%c0_40, %c0_41], %58 {strides = array<i32>} : memref<8x8xf32, #tpu.memory_space<vmem>>, vector<8x8xf32>,
    return
  }
  func.func @transform_0(%arg0: i32) -> (i32, i32) {
    %c0_i32 = arith.constant 0 : i32
    %c0_i32_0 = arith.constant 0 : i32
    return %arg0, %c0_i32 : i32, i32
  }
  func.func @transform_1(%arg0: i32) -> (i32, i32) {
    %c0_i32 = arith.constant 0 : i32
    %c0_i32_0 = arith.constant 0 : i32
    %c0_i32_1 = arith.constant 0 : i32
    return %c0_i32, %c0_i32_0 : i32, i32
  }
  func.func @transform_2(%arg0: i32) -> (i32, i32) {
    %c0_i32 = arith.constant 0 : i32
    %c0_i32_0 = arith.constant 0 : i32
    %c0_i32_1 = arith.constant 0 : i32
    return %c0_i32, %c0_i32_0 : i32, i32
  }
  func.func @transform_3(%arg0: i32) -> (i32, i32, i32) {
    %c0_i32 = arith.constant 0 : i32
    %c0_i32_0 = arith.constant 0 : i32
    %c0_i32_1 = arith.constant 0 : i32
    %c0_i32_2 = arith.constant 0 : i32
    return %c0_i32, %c0_i32_0, %c0_i32_1 : i32, i32, i32
  }
  func.func @transform_4(%arg0: i32) -> (i32, i32, i32) {
    %c0_i32 = arith.constant 0 : i32
    %c0_i32_0 = arith.constant 0 : i32
    %c0_i32_1 = arith.constant 0 : i32
    %c0_i32_2 = arith.constant 0 : i32
    return %c0_i32, %c0_i32_0, %c0_i32_1 : i32, i32, i32
  }
  func.func @transform_5(%arg0: i32) -> (i32, i32) {
    %c0_i32 = arith.constant 0 : i32
    %c0_i32_0 = arith.constant 0 : i32
    %c0_i32_1 = arith.constant 0 : i32
    return %c0_i32, %c0_i32_0 : i32, i32
  }
  func.func @transform_6(%arg0: i32) -> (i32, i32) {
    %c0_i32 = arith.constant 0 : i32
    %c0_i32_0 = arith.constant 0 : i32
    %c0_i32_1 = arith.constant 0 : i32
    return %c0_i32, %c0_i32_0 : i32, i32
  }
  func.func @transform_7(%arg0: i32) -> (i32, i32) {
    %c0_i32 = arith.constant 0 : i32
    %c0_i32_0 = arith.constant 0 : i32
    return %arg0, %c0_i32 : i32, i32
  }
}

</mosaic_0001>

<llo_original>
// kernel: tpu_custom_call.1
$region0: #{tpu_custom_call.1}
  #allocation0 [shape = 'u32[]', space=smem, size = 0x4, offset = 0x4, fixed_abs, tag = 'smem constant byte address 0x4 - core index']
  #allocation1 [shape = 'u32[144,128]{1,0:T(1,128)}', space=vmem, size = 0x12000, scoped, tag = 'internal scratch']
  %s0 = inlined_call_operand.vmem [shape: f32[2,768], index: 0, kind: input, shape index: {}]
  %s1 = inlined_call_operand.hbm [shape: bf16[768,128], index: 1, kind: input, shape index: {}]
  %s2 = inlined_call_operand.vmem [shape: f32[1,128], index: 2, kind: input, shape index: {}]
  %s3 = inlined_call_operand.hbm [shape: bf16[4,128,128], index: 3, kind: input, shape index: {}]
  %s4 = inlined_call_operand.vmem [shape: f32[4,1,128], index: 4, kind: input, shape index: {}]
  %s5 = inlined_call_operand.vmem [shape: bf16[128,8], index: 5, kind: input, shape index: {}]
  %s6 = inlined_call_operand.vmem [shape: f32[1,8], index: 6, kind: input, shape index: {}]
  %s7 = inlined_call_operand.hbm [shape: f32[2,8], index: 7, kind: output, shape index: {}]
  %s8 = sld [smem:[#allocation0]]
  $region46: #{tpu_custom_call.1} parent=0
    _
  %s10 = ssub.s32 1, %s8
  %s11 = scalar_select 0, %s10, %s8
  $region1: #{tpu_custom_call.1} parent=0
    #allocation2 [shape = 'u8[196608]{0}', space=vmem, size = 0x30000, scoped, tag = 'input window, operand 1, single buffered']
    #allocation3 [shape = 's32[1]{0}', space=sflag, size = 0x4, scoped, tag = 'scoped memory for tpu_custom_call.1']
    #allocation4 [shape = 's32[1]{0}', space=sflag, size = 0x4, scoped, tag = 'scoped memory for tpu_custom_call.1']
    #allocation5 [shape = 'u8[131072]{0}', space=vmem, size = 0x20000, scoped, tag = 'input window, operand 3, single buffered']
    #allocation6 [shape = 's32[1]{0}', space=sflag, size = 0x4, scoped, tag = 'scoped memory for tpu_custom_call.1']
    #allocation7 [shape = 'u8[4096]{0}', space=vmem, size = 0x1000, scoped, tag = 'output window, operand 0, single buffered']
    %12 = vsyncpa [#allocation3], 0
    %13 = vsyncpa [#allocation6], 0
    %14 = vsyncpa [#allocation4], 0
    // Predicated region
    $region2: #{tpu_custom_call.1} parent=1 // pred_check
      _
    $region3: #{tpu_custom_call.1} parent=1 // pred_check_branch
      %16 = sbr.rel (0) target = $region5
    $region4: #{tpu_custom_call.1} parent=1 // pred_region
      _
    $region5: #{tpu_custom_call.1} parent=1 // pred_fallthru
      _
    // Predicated region
    $region6: #{tpu_custom_call.1} parent=1 // pred_check
      _
    $region7: #{tpu_custom_call.1} parent=1 // pred_check_branch
      %18 = sbr.rel (0) target = $region9
    $region8: #{tpu_custom_call.1} parent=1 // pred_region
      %s20 = ssub.s32 6144, 6144
      %21 = vsyncadd [#allocation3], %s20
      %s22 = sshll.u32 [#allocation2], 4
      %s23 = int_to_ptr.vmem [resolvable:$true] %s22
      %28 = dma.hbm_to_vmem [thread:$0]  %s1, 6144, %s23, [#allocation3], 64, 64, 4
    $region9: #{tpu_custom_call.1} parent=1 // pred_fallthru
      _
    // Predicated region
    $region10: #{tpu_custom_call.1} parent=1 // pred_check
      _
    $region11: #{tpu_custom_call.1} parent=1 // pred_check_branch
      %30 = sbr.rel (0) target = $region13
    $region12: #{tpu_custom_call.1} parent=1 // pred_region
      _
    $region13: #{tpu_custom_call.1} parent=1 // pred_fallthru
      _
    // Predicated region
    $region14: #{tpu_custom_call.1} parent=1 // pred_check
      _
    $region15: #{tpu_custom_call.1} parent=1 // pred_check_branch
      %32 = sbr.rel (0) target = $region17
    $region16: #{tpu_custom_call.1} parent=1 // pred_region
      %s34 = ssub.s32 4096, 4096
      %35 = vsyncadd [#allocation6], %s34
      %s36 = sshll.u32 [#allocation5], 4
      %s37 = int_to_ptr.vmem [resolvable:$true] %s36
      %42 = dma.hbm_to_vmem [thread:$0]  %s3, 4096, %s37, [#allocation6], 64, 64, 4
    $region17: #{tpu_custom_call.1} parent=1 // pred_fallthru
      _
    // Predicated region
    $region18: #{tpu_custom_call.1} parent=1 // pred_check
      _
    $region19: #{tpu_custom_call.1} parent=1 // pred_check_branch
      %44 = sbr.rel (0) target = $region21
    $region20: #{tpu_custom_call.1} parent=1 // pred_region
      _
    $region21: #{tpu_custom_call.1} parent=1 // pred_fallthru
      _
    // Predicated region
    $region22: #{tpu_custom_call.1} parent=1 // pred_check
      _
    $region23: #{tpu_custom_call.1} parent=1 // pred_check_branch
      %46 = sbr.rel (0) target = $region25
    $region24: #{tpu_custom_call.1} parent=1 // pred_region
      _
    $region25: #{tpu_custom_call.1} parent=1 // pred_fallthru
      _
    // Predicated region
    $region26: #{tpu_custom_call.1} parent=1 // pred_check
      _
    $region27: #{tpu_custom_call.1} parent=1 // pred_check_branch
      %48 = sbr.rel (0) target = $region29
    $region28: #{tpu_custom_call.1} parent=1 // pred_region
      _
    $region29: #{tpu_custom_call.1} parent=1 // pred_fallthru
      _
    // Predicated region
    $region30: #{tpu_custom_call.1} parent=1 // pred_check
      _
    $region31: #{tpu_custom_call.1} parent=1 // pred_check_branch
      %50 = sbr.rel (0) target = $region33
    $region32: #{tpu_custom_call.1} parent=1 // pred_region
      %51 = dma.done [#allocation3], 6144
    $region33: #{tpu_custom_call.1} parent=1 // pred_fallthru
      _
    // Predicated region
    $region34: #{tpu_custom_call.1} parent=1 // pred_check
      _
    $region35: #{tpu_custom_call.1} parent=1 // pred_check_branch
      %53 = sbr.rel (0) target = $region37
    $region36: #{tpu_custom_call.1} parent=1 // pred_region
      %54 = dma.done [#allocation6], 4096
    $region37: #{tpu_custom_call.1} parent=1 // pred_fallthru
      _
    %v56 = vld [vmem:[%s0] sm:$0xff]
    %v57 = vld [vmem:[%s0 + $0x8] sm:$0xf]
    %v58 = vld [vmem:[%s0 + $0xc] sm:$0xff]
    %v59 = vld [vmem:[%s0 + $0x14] sm:$0xf]
    %v60 = vld [vmem:[%s0 + $0x18] sm:$0xff]
    %v61 = vld [vmem:[%s0 + $0x20] sm:$0xf]
    %v62 = vld [vmem:[%s0 + $0x24] sm:$0xff]
    %v63 = vld [vmem:[%s0 + $0x2c] sm:$0xf]
    %v72 = vcombine.low %v56, %v58
    %v73 = vcombine.high %v56, %v58
    %v74 = vcombine.low %v60, %v62
    %v75 = vcombine.high %v60, %v62
    %v77 = vunpack.c.l.s4 1983009808
    %v78 = vunpack.c.0.s8 %v77
    %v79 = vlaneseq
    %v80 = vshrl.u32 %v79, 7
    %v81 = vsub.s32 %v78, %v80
    %v82 = vrot.slane %v72, %v81
    %v84 = vunpack.c.l.s4 1983009808
    %v85 = vunpack.c.0.s8 %v84
    %v86 = vlaneseq
    %v87 = vshrl.u32 %v86, 7
    %v88 = vsub.s32 %v85, %v87
    %v89 = vrot.slane %v73, %v88
    %v91 = vunpack.c.l.s4 1983009808
    %v92 = vunpack.c.0.s8 %v91
    %v93 = vlaneseq
    %v94 = vshrl.u32 %v93, 7
    %v95 = vsub.s32 %v92, %v94
    %v96 = vrot.slane %v74, %v95
    %v98 = vunpack.c.l.s4 1983009808
    %v99 = vunpack.c.0.s8 %v98
    %v100 = vlaneseq
    %v101 = vshrl.u32 %v100, 7
    %v102 = vsub.s32 %v99, %v101
    %v103 = vrot.slane %v75, %v102
    %v104 = vcombine.low %v82, %v96
    %v105 = vcombine.high %v82, %v96
    %v106 = vcombine.low %v89, %v103
    %v107 = vcombine.high %v89, %v103
    %v108 = vcombine.low %v57, %v59
    %v109 = vcombine.low %v61, %v63
    %v111 = vunpack.c.l.s4 1983009808
    %v112 = vunpack.c.0.s8 %v111
    %v113 = vlaneseq
    %v114 = vshrl.u32 %v113, 7
    %v115 = vsub.s32 %v112, %v114
    %v116 = vrot.slane %v108, %v115
    %v118 = vunpack.c.l.s4 1983009808
    %v119 = vunpack.c.0.s8 %v118
    %v120 = vlaneseq
    %v121 = vshrl.u32 %v120, 7
    %v122 = vsub.s32 %v119, %v121
    %v123 = vrot.slane %v109, %v122
    %v124 = vcombine.low %v116, %v123
    %v125 = vcombine.high %v116, %v123
    %v132 = vpack.c.bf16 %v104, %v104
    %v133 = vpack.c.bf16 %v105, %v105
    %v134 = vpack.c.bf16 %v106, %v106
    %v135 = vpack.c.bf16 %v107, %v107
    %v136 = vpack.c.bf16 %v124, %v124
    %v137 = vpack.c.bf16 %v125, %v125
    %v138 = vld [vmem:[#allocation2] sm:$0xf]
    %v139 = vld [vmem:[#allocation2 + $0x4] sm:$0xf]
    %v140 = vld [vmem:[#allocation2 + $0x8] sm:$0xf]
    %v141 = vld [vmem:[#allocation2 + $0xc] sm:$0xf]
    %v142 = vld [vmem:[#allocation2 + $0x10] sm:$0xf]
    %v143 = vld [vmem:[#allocation2 + $0x14] sm:$0xf]
    %v144 = vld [vmem:[#allocation2 + $0x18] sm:$0xf]
    %v145 = vld [vmem:[#allocation2 + $0x1c] sm:$0xf]
    %v146 = vld [vmem:[#allocation2 + $0x20] sm:$0xf]
    %v147 = vld [vmem:[#allocation2 + $0x24] sm:$0xf]
    %v148 = vld [vmem:[#allocation2 + $0x28] sm:$0xf]
    %v149 = vld [vmem:[#allocation2 + $0x2c] sm:$0xf]
    %v150 = vld [vmem:[#allocation2 + $0x30] sm:$0xf]
    %v151 = vld [vmem:[#allocation2 + $0x34] sm:$0xf]
    %v152 = vld [vmem:[#allocation2 + $0x38] sm:$0xf]
    %v153 = vld [vmem:[#allocation2 + $0x3c] sm:$0xf]
    %v154 = vld [vmem:[#allocation2 + $0x40] sm:$0xf]
    %v155 = vld [vmem:[#allocation2 + $0x44] sm:$0xf]
    %v156 = vld [vmem:[#allocation2 + $0x48] sm:$0xf]
    %v157 = vld [vmem:[#allocation2 + $0x4c] sm:$0xf]
    %v158 = vld [vmem:[#allocation2 + $0x50] sm:$0xf]
    %v159 = vld [vmem:[#allocation2 + $0x54] sm:$0xf]
    %v160 = vld [vmem:[#allocation2 + $0x58] sm:$0xf]
    %v161 = vld [vmem:[#allocation2 + $0x5c] sm:$0xf]
    %v162 = vld [vmem:[#allocation2 + $0x60] sm:$0xf]
    %v163 = vld [vmem:[#allocation2 + $0x64] sm:$0xf]
    %v164 = vld [vmem:[#allocation2 + $0x68] sm:$0xf]
    %v165 = vld [vmem:[#allocation2 + $0x6c] sm:$0xf]
    %v166 = vld [vmem:[#allocation2 + $0x70] sm:$0xf]
    %v167 = vld [vmem:[#allocation2 + $0x74] sm:$0xf]
    %v168 = vld [vmem:[#allocation2 + $0x78] sm:$0xf]
    %v169 = vld [vmem:[#allocation2 + $0x7c] sm:$0xf]
    %v170 = vld [vmem:[#allocation2 + $0x80] sm:$0xf]
    %v171 = vld [vmem:[#allocation2 + $0x84] sm:$0xf]
    %v172 = vld [vmem:[#allocation2 + $0x88] sm:$0xf]
    %v173 = vld [vmem:[#allocation2 + $0x8c] sm:$0xf]
    %v174 = vld [vmem:[#allocation2 + $0x90] sm:$0xf]
    %v175 = vld [vmem:[#allocation2 + $0x94] sm:$0xf]
    %v176 = vld [vmem:[#allocation2 + $0x98] sm:$0xf]
    %v177 = vld [vmem:[#allocation2 + $0x9c] sm:$0xf]
    %v178 = vld [vmem:[#allocation2 + $0xa0] sm:$0xf]
    %v179 = vld [vmem:[#allocation2 + $0xa4] sm:$0xf]
    %v180 = vld [vmem:[#allocation2 + $0xa8] sm:$0xf]
    %v181 = vld [vmem:[#allocation2 + $0xac] sm:$0xf]
    %v182 = vld [vmem:[#allocation2 + $0xb0] sm:$0xf]
    %v183 = vld [vmem:[#allocation2 + $0xb4] sm:$0xf]
    %v184 = vld [vmem:[#allocation2 + $0xb8] sm:$0xf]
    %v185 = vld [vmem:[#allocation2 + $0xbc] sm:$0xf]
    %v186 = vld [vmem:[#allocation2 + $0xc0] sm:$0xf]
    %v187 = vld [vmem:[#allocation2 + $0xc4] sm:$0xf]
    %v188 = vld [vmem:[#allocation2 + $0xc8] sm:$0xf]
    %v189 = vld [vmem:[#allocation2 + $0xcc] sm:$0xf]
    %v190 = vld [vmem:[#allocation2 + $0xd0] sm:$0xf]
    %v191 = vld [vmem:[#allocation2 + $0xd4] sm:$0xf]
    %v192 = vld [vmem:[#allocation2 + $0xd8] sm:$0xf]
    %v193 = vld [vmem:[#allocation2 + $0xdc] sm:$0xf]
    %v194 = vld [vmem:[#allocation2 + $0xe0] sm:$0xf]
    %v195 = vld [vmem:[#allocation2 + $0xe4] sm:$0xf]
    %v196 = vld [vmem:[#allocation2 + $0xe8] sm:$0xf]
    %v197 = vld [vmem:[#allocation2 + $0xec] sm:$0xf]
    %v198 = vld [vmem:[#allocation2 + $0xf0] sm:$0xf]
    %v199 = vld [vmem:[#allocation2 + $0xf4] sm:$0xf]
    %v200 = vld [vmem:[#allocation2 + $0xf8] sm:$0xf]
    %v201 = vld [vmem:[#allocation2 + $0xfc] sm:$0xf]
    %v202 = vld [vmem:[#allocation2 + $0x100] sm:$0xf]
    %v203 = vld [vmem:[#allocation2 + $0x104] sm:$0xf]
    %v204 = vld [vmem:[#allocation2 + $0x108] sm:$0xf]
    %v205 = vld [vmem:[#allocation2 + $0x10c] sm:$0xf]
    %v206 = vld [vmem:[#allocation2 + $0x110] sm:$0xf]
    %v207 = vld [vmem:[#allocation2 + $0x114] sm:$0xf]
    %v208 = vld [vmem:[#allocation2 + $0x118] sm:$0xf]
    %v209 = vld [vmem:[#allocation2 + $0x11c] sm:$0xf]
    %v210 = vld [vmem:[#allocation2 + $0x120] sm:$0xf]
    %v211 = vld [vmem:[#allocation2 + $0x124] sm:$0xf]
    %v212 = vld [vmem:[#allocation2 + $0x128] sm:$0xf]
    %v213 = vld [vmem:[#allocation2 + $0x12c] sm:$0xf]
    %v214 = vld [vmem:[#allocation2 + $0x130] sm:$0xf]
    %v215 = vld [vmem:[#allocation2 + $0x134] sm:$0xf]
    %v216 = vld [vmem:[#allocation2 + $0x138] sm:$0xf]
    %v217 = vld [vmem:[#allocation2 + $0x13c] sm:$0xf]
    %v218 = vld [vmem:[#allocation2 + $0x140] sm:$0xf]
    %v219 = vld [vmem:[#allocation2 + $0x144] sm:$0xf]
    %v220 = vld [vmem:[#allocation2 + $0x148] sm:$0xf]
    %v221 = vld [vmem:[#allocation2 + $0x14c] sm:$0xf]
    %v222 = vld [vmem:[#allocation2 + $0x150] sm:$0xf]
    %v223 = vld [vmem:[#allocation2 + $0x154] sm:$0xf]
    %v224 = vld [vmem:[#allocation2 + $0x158] sm:$0xf]
    %v225 = vld [vmem:[#allocation2 + $0x15c] sm:$0xf]
    %v226 = vld [vmem:[#allocation2 + $0x160] sm:$0xf]
    %v227 = vld [vmem:[#allocation2 + $0x164] sm:$0xf]
    %v228 = vld [vmem:[#allocation2 + $0x168] sm:$0xf]
    %v229 = vld [vmem:[#allocation2 + $0x16c] sm:$0xf]
    %v230 = vld [vmem:[#allocation2 + $0x170] sm:$0xf]
    %v231 = vld [vmem:[#allocation2 + $0x174] sm:$0xf]
    %v232 = vld [vmem:[#allocation2 + $0x178] sm:$0xf]
    %v233 = vld [vmem:[#allocation2 + $0x17c] sm:$0xf]
    %v234 = vld [vmem:[%s2] sm:$0x1]
    %v236 = vlaneseq
    %v237 = vshrl.u32 %v236, 7
    %v238 = vsub.s32 0, %v237
    %v239 = vrot.slane %v234, %v238
    %v337 = vunpack.c.l.b16 %v138
    %v338 = vunpack.c.l.b16 %v139
    %v339 = vunpack.c.l.b16 %v140
    %v340 = vunpack.c.l.b16 %v141
    %v341 = vunpack.c.l.b16 %v142
    %v342 = vunpack.c.l.b16 %v143
    %v343 = vunpack.c.l.b16 %v144
    %v344 = vunpack.c.l.b16 %v145
    %v345 = vunpack.c.l.b16 %v146
    %v346 = vunpack.c.l.b16 %v147
    %v347 = vunpack.c.l.b16 %v148
    %v348 = vunpack.c.l.b16 %v149
    %v349 = vunpack.c.l.b16 %v150
    %v350 = vunpack.c.l.b16 %v151
    %v351 = vunpack.c.l.b16 %v152
    %v352 = vunpack.c.l.b16 %v153
    %v353 = vunpack.c.l.b16 %v154
    %v354 = vunpack.c.l.b16 %v155
    %v355 = vunpack.c.l.b16 %v156
    %v356 = vunpack.c.l.b16 %v157
    %v357 = vunpack.c.l.b16 %v158
    %v358 = vunpack.c.l.b16 %v159
    %v359 = vunpack.c.l.b16 %v160
    %v360 = vunpack.c.l.b16 %v161
    %v361 = vunpack.c.l.b16 %v162
    %v362 = vunpack.c.l.b16 %v163
    %v363 = vunpack.c.l.b16 %v164
    %v364 = vunpack.c.l.b16 %v165
    %v365 = vunpack.c.l.b16 %v166
    %v366 = vunpack.c.l.b16 %v167
    %v367 = vunpack.c.l.b16 %v168
    %v368 = vunpack.c.l.b16 %v169
    %v369 = vunpack.c.l.b16 %v170
    %v370 = vunpack.c.l.b16 %v171
    %v371 = vunpack.c.l.b16 %v172
    %v372 = vunpack.c.l.b16 %v173
    %v373 = vunpack.c.l.b16 %v174
    %v374 = vunpack.c.l.b16 %v175
    %v375 = vunpack.c.l.b16 %v176
    %v376 = vunpack.c.l.b16 %v177
    %v377 = vunpack.c.l.b16 %v178
    %v378 = vunpack.c.l.b16 %v179
    %v379 = vunpack.c.l.b16 %v180
    %v380 = vunpack.c.l.b16 %v181
    %v381 = vunpack.c.l.b16 %v182
    %v382 = vunpack.c.l.b16 %v183
    %v383 = vunpack.c.l.b16 %v184
    %v384 = vunpack.c.l.b16 %v185
    %v385 = vunpack.c.l.b16 %v186
    %v386 = vunpack.c.l.b16 %v187
    %v387 = vunpack.c.l.b16 %v188
    %v388 = vunpack.c.l.b16 %v189
    %v389 = vunpack.c.l.b16 %v190
    %v390 = vunpack.c.l.b16 %v191
    %v391 = vunpack.c.l.b16 %v192
    %v392 = vunpack.c.l.b16 %v193
    %v393 = vunpack.c.l.b16 %v194
    %v394 = vunpack.c.l.b16 %v195
    %v395 = vunpack.c.l.b16 %v196
    %v396 = vunpack.c.l.b16 %v197
    %v397 = vunpack.c.l.b16 %v198
    %v398 = vunpack.c.l.b16 %v199
    %v399 = vunpack.c.l.b16 %v200
    %v400 = vunpack.c.l.b16 %v201
    %v401 = vunpack.c.l.b16 %v202
    %v402 = vunpack.c.l.b16 %v203
    %v403 = vunpack.c.l.b16 %v204
    %v404 = vunpack.c.l.b16 %v205
    %v405 = vunpack.c.l.b16 %v206
    %v406 = vunpack.c.l.b16 %v207
    %v407 = vunpack.c.l.b16 %v208
    %v408 = vunpack.c.l.b16 %v209
    %v409 = vunpack.c.l.b16 %v210
    %v410 = vunpack.c.l.b16 %v211
    %v411 = vunpack.c.l.b16 %v212
    %v412 = vunpack.c.l.b16 %v213
    %v413 = vunpack.c.l.b16 %v214
    %v414 = vunpack.c.l.b16 %v215
    %v415 = vunpack.c.l.b16 %v216
    %v416 = vunpack.c.l.b16 %v217
    %v417 = vunpack.c.l.b16 %v218
    %v418 = vunpack.c.l.b16 %v219
    %v419 = vunpack.c.l.b16 %v220
    %v420 = vunpack.c.l.b16 %v221
    %v421 = vunpack.c.l.b16 %v222
    %v422 = vunpack.c.l.b16 %v223
    %v423 = vunpack.c.l.b16 %v224
    %v424 = vunpack.c.l.b16 %v225
    %v425 = vunpack.c.l.b16 %v226
    %v426 = vunpack.c.l.b16 %v227
    %v427 = vunpack.c.l.b16 %v228
    %v428 = vunpack.c.l.b16 %v229
    %v429 = vunpack.c.l.b16 %v230
    %v430 = vunpack.c.l.b16 %v231
    %v431 = vunpack.c.l.b16 %v232
    %v432 = vunpack.c.l.b16 %v233
    %v433 = vpack.c.b16 %v338, %v337
    %v434 = vpack.c.b16 %v340, %v339
    %v435 = vpack.c.b16 %v342, %v341
    %v436 = vpack.c.b16 %v344, %v343
    %v437 = vpack.c.b16 %v346, %v345
    %v438 = vpack.c.b16 %v348, %v347
    %v439 = vpack.c.b16 %v350, %v349
    %v440 = vpack.c.b16 %v352, %v351
    %v441 = vpack.c.b16 %v354, %v353
    %v442 = vpack.c.b16 %v356, %v355
    %v443 = vpack.c.b16 %v358, %v357
    %v444 = vpack.c.b16 %v360, %v359
    %v445 = vpack.c.b16 %v362, %v361
    %v446 = vpack.c.b16 %v364, %v363
    %v447 = vpack.c.b16 %v366, %v365
    %v448 = vpack.c.b16 %v368, %v367
    %v449 = vpack.c.b16 %v370, %v369
    %v450 = vpack.c.b16 %v372, %v371
    %v451 = vpack.c.b16 %v374, %v373
    %v452 = vpack.c.b16 %v376, %v375
    %v453 = vpack.c.b16 %v378, %v377
    %v454 = vpack.c.b16 %v380, %v379
    %v455 = vpack.c.b16 %v382, %v381
    %v456 = vpack.c.b16 %v384, %v383
    %v457 = vpack.c.b16 %v386, %v385
    %v458 = vpack.c.b16 %v388, %v387
    %v459 = vpack.c.b16 %v390, %v389
    %v460 = vpack.c.b16 %v392, %v391
    %v461 = vpack.c.b16 %v394, %v393
    %v462 = vpack.c.b16 %v396, %v395
    %v463 = vpack.c.b16 %v398, %v397
    %v464 = vpack.c.b16 %v400, %v399
    %v465 = vpack.c.b16 %v402, %v401
    %v466 = vpack.c.b16 %v404, %v403
    %v467 = vpack.c.b16 %v406, %v405
    %v468 = vpack.c.b16 %v408, %v407
    %v469 = vpack.c.b16 %v410, %v409
    %v470 = vpack.c.b16 %v412, %v411
    %v471 = vpack.c.b16 %v414, %v413
    %v472 = vpack.c.b16 %v416, %v415
    %v473 = vpack.c.b16 %v418, %v417
    %v474 = vpack.c.b16 %v420, %v419
    %v475 = vpack.c.b16 %v422, %v421
    %v476 = vpack.c.b16 %v424, %v423
    %v477 = vpack.c.b16 %v426, %v425
    %v478 = vpack.c.b16 %v428, %v427
    %v479 = vpack.c.b16 %v430, %v429
    %v480 = vpack.c.b16 %v432, %v431
    %529 = vmatprep.subr.bf16.mxu0 0
    %530 = vmatpush1.bf16.msra.mxu0 %v433
    %531 = vmatprep.subr.bf16.mxu0 0
    %532 = vmatpush1.bf16.msra.mxu0 %v434
    %533 = vmatprep.subr.bf16.mxu0 0
    %534 = vmatpush1.bf16.msra.mxu0 %v435
    %535 = vmatprep.subr.bf16.mxu0 0
    %536 = vmatpush1.bf16.msra.mxu0 %v436
    %537 = vmatprep.subr.bf16.mxu0 0
    %538 = vmatpush1.bf16.msra.mxu0 %v437
    %539 = vmatprep.subr.bf16.mxu0 0
    %540 = vmatpush1.bf16.msra.mxu0 %v438
    %541 = vmatprep.subr.bf16.mxu0 0
    %542 = vmatpush1.bf16.msra.mxu0 %v439
    %543 = vmatprep.subr.bf16.mxu0 0
    %544 = vmatpush1.bf16.msra.mxu0 %v440
    %545 = vmatprep.subr.bf16.mxu0 0
    %546 = vmatpush1.bf16.msra.mxu0 %v441
    %547 = vmatprep.subr.bf16.mxu0 0
    %548 = vmatpush1.bf16.msra.mxu0 %v442
    %549 = vmatprep.subr.bf16.mxu0 0
    %550 = vmatpush1.bf16.msra.mxu0 %v443
    %551 = vmatprep.subr.bf16.mxu0 0
    %552 = vmatpush1.bf16.msra.mxu0 %v444
    %553 = vmatprep.subr.bf16.mxu0 0
    %554 = vmatpush1.bf16.msra.mxu0 %v445
    %555 = vmatprep.subr.bf16.mxu0 0
    %556 = vmatpush1.bf16.msra.mxu0 %v446
    %557 = vmatprep.subr.bf16.mxu0 0
    %558 = vmatpush1.bf16.msra.mxu0 %v447
    %559 = vmatprep.subr.bf16.mxu0 0
    %560 = vmatpush1.bf16.msra.mxu0 %v448
    %561 = vmatprep.mubr.bf16.mxu0 %v133
    %562 = vmatmul.mubr.bf16.gmra.mrb[0].mxu0 %v132
    %v563 = vpop.f32.mrb[0].mxu0
    %v564 = vadd.f32 %v239, %v563
    %v565 = vpop.f32.mrb[0].mxu0
    %v566 = vpop.f32.mrb[0].mxu0
    %v567 = vpop.f32.mrb[0].mxu0
    %568 = vdwg.mxu0
    %569 = vmatprep.subr.bf16.mxu0 0
    %570 = vmatpush1.bf16.msra.mxu0 %v449
    %571 = vmatprep.subr.bf16.mxu0 0
    %572 = vmatpush1.bf16.msra.mxu0 %v450
    %573 = vmatprep.subr.bf16.mxu0 0
    %574 = vmatpush1.bf16.msra.mxu0 %v451
    %575 = vmatprep.subr.bf16.mxu0 0
    %576 = vmatpush1.bf16.msra.mxu0 %v452
    %577 = vmatprep.subr.bf16.mxu0 0
    %578 = vmatpush1.bf16.msra.mxu0 %v453
    %579 = vmatprep.subr.bf16.mxu0 0
    %580 = vmatpush1.bf16.msra.mxu0 %v454
    %581 = vmatprep.subr.bf16.mxu0 0
    %582 = vmatpush1.bf16.msra.mxu0 %v455
    %583 = vmatprep.subr.bf16.mxu0 0
    %584 = vmatpush1.bf16.msra.mxu0 %v456
    %585 = vmatprep.subr.bf16.mxu0 0
    %586 = vmatpush1.bf16.msra.mxu0 %v457
    %587 = vmatprep.subr.bf16.mxu0 0
    %588 = vmatpush1.bf16.msra.mxu0 %v458
    %589 = vmatprep.subr.bf16.mxu0 0
    %590 = vmatpush1.bf16.msra.mxu0 %v459
    %591 = vmatprep.subr.bf16.mxu0 0
    %592 = vmatpush1.bf16.msra.mxu0 %v460
    %593 = vmatprep.subr.bf16.mxu0 0
    %594 = vmatpush1.bf16.msra.mxu0 %v461
    %595 = vmatprep.subr.bf16.mxu0 0
    %596 = vmatpush1.bf16.msra.mxu0 %v462
    %597 = vmatprep.subr.bf16.mxu0 0
    %598 = vmatpush1.bf16.msra.mxu0 %v463
    %599 = vmatprep.subr.bf16.mxu0 0
    %600 = vmatpush1.bf16.msra.mxu0 %v464
    %601 = vmatprep.mubr.bf16.mxu0 %v135
    %602 = vmatmul.mubr.bf16.gmra.mrb[0].mxu0 %v134
    %v603 = vpop.f32.mrb[0].mxu0
    %v604 = vadd.f32 %v564, %v603
    %v605 = vpop.f32.mrb[0].mxu0
    %v606 = vpop.f32.mrb[0].mxu0
    %v607 = vpop.f32.mrb[0].mxu0
    %608 = vdwg.mxu0
    %609 = vmatprep.subr.bf16.mxu0 0
    %610 = vmatpush1.bf16.msra.mxu0 %v465
    %611 = vmatprep.subr.bf16.mxu0 0
    %612 = vmatpush1.bf16.msra.mxu0 %v466
    %613 = vmatprep.subr.bf16.mxu0 0
    %614 = vmatpush1.bf16.msra.mxu0 %v467
    %615 = vmatprep.subr.bf16.mxu0 0
    %616 = vmatpush1.bf16.msra.mxu0 %v468
    %617 = vmatprep.subr.bf16.mxu0 0
    %618 = vmatpush1.bf16.msra.mxu0 %v469
    %619 = vmatprep.subr.bf16.mxu0 0
    %620 = vmatpush1.bf16.msra.mxu0 %v470
    %621 = vmatprep.subr.bf16.mxu0 0
    %622 = vmatpush1.bf16.msra.mxu0 %v471
    %623 = vmatprep.subr.bf16.mxu0 0
    %624 = vmatpush1.bf16.msra.mxu0 %v472
    %625 = vmatprep.subr.bf16.mxu0 0
    %626 = vmatpush1.bf16.msra.mxu0 %v473
    %627 = vmatprep.subr.bf16.mxu0 0
    %628 = vmatpush1.bf16.msra.mxu0 %v474
    %629 = vmatprep.subr.bf16.mxu0 0
    %630 = vmatpush1.bf16.msra.mxu0 %v475
    %631 = vmatprep.subr.bf16.mxu0 0
    %632 = vmatpush1.bf16.msra.mxu0 %v476
    %633 = vmatprep.subr.bf16.mxu0 0
    %634 = vmatpush1.bf16.msra.mxu0 %v477
    %635 = vmatprep.subr.bf16.mxu0 0
    %636 = vmatpush1.bf16.msra.mxu0 %v478
    %637 = vmatprep.subr.bf16.mxu0 0
    %638 = vmatpush1.bf16.msra.mxu0 %v479
    %639 = vmatprep.subr.bf16.mxu0 0
    %640 = vmatpush1.bf16.msra.mxu0 %v480
    %641 = vmatprep.mubr.bf16.mxu0 %v137
    %642 = vmatmul.mubr.bf16.gmra.mrb[0].mxu0 %v136
    %v643 = vpop.f32.mrb[0].mxu0
    %v644 = vadd.f32 %v604, %v643
    %v645 = vpop.f32.mrb[0].mxu0
    %v646 = vpop.f32.mrb[0].mxu0
    %v647 = vpop.f32.mrb[0].mxu0
    %648 = vdwg.mxu0
    %v649 = vmax.f32 %v644, 0.0
    %v650 = vpack.c.bf16 %v649, %v649
    %v651 = vld [vmem:[#allocation5] sm:$0xf]
    %v652 = vld [vmem:[#allocation5 + $0x4] sm:$0xf]
    %v653 = vld [vmem:[#allocation5 + $0x8] sm:$0xf]
    %v654 = vld [vmem:[#allocation5 + $0xc] sm:$0xf]
    %v655 = vld [vmem:[#allocation5 + $0x10] sm:$0xf]
    %v656 = vld [vmem:[#allocation5 + $0x14] sm:$0xf]
    %v657 = vld [vmem:[#allocation5 + $0x18] sm:$0xf]
    %v658 = vld [vmem:[#allocation5 + $0x1c] sm:$0xf]
    %v659 = vld [vmem:[#allocation5 + $0x20] sm:$0xf]
    %v660 = vld [vmem:[#allocation5 + $0x24] sm:$0xf]
    %v661 = vld [vmem:[#allocation5 + $0x28] sm:$0xf]
    %v662 = vld [vmem:[#allocation5 + $0x2c] sm:$0xf]
    %v663 = vld [vmem:[#allocation5 + $0x30] sm:$0xf]
    %v664 = vld [vmem:[#allocation5 + $0x34] sm:$0xf]
    %v665 = vld [vmem:[#allocation5 + $0x38] sm:$0xf]
    %v666 = vld [vmem:[#allocation5 + $0x3c] sm:$0xf]
    %v667 = vld [vmem:[%s4] sm:$0x1]
    %v669 = vlaneseq
    %v670 = vshrl.u32 %v669, 7
    %v671 = vsub.s32 0, %v670
    %v672 = vrot.slane %v667, %v671
    %v690 = vunpack.c.l.b16 %v651
    %v691 = vunpack.c.l.b16 %v652
    %v692 = vunpack.c.l.b16 %v653
    %v693 = vunpack.c.l.b16 %v654
    %v694 = vunpack.c.l.b16 %v655
    %v695 = vunpack.c.l.b16 %v656
    %v696 = vunpack.c.l.b16 %v657
    %v697 = vunpack.c.l.b16 %v658
    %v698 = vunpack.c.l.b16 %v659
    %v699 = vunpack.c.l.b16 %v660
    %v700 = vunpack.c.l.b16 %v661
    %v701 = vunpack.c.l.b16 %v662
    %v702 = vunpack.c.l.b16 %v663
    %v703 = vunpack.c.l.b16 %v664
    %v704 = vunpack.c.l.b16 %v665
    %v705 = vunpack.c.l.b16 %v666
    %v706 = vpack.c.b16 %v691, %v690
    %v707 = vpack.c.b16 %v693, %v692
    %v708 = vpack.c.b16 %v695, %v694
    %v709 = vpack.c.b16 %v697, %v696
    %v710 = vpack.c.b16 %v699, %v698
    %v711 = vpack.c.b16 %v701, %v700
    %v712 = vpack.c.b16 %v703, %v702
    %v713 = vpack.c.b16 %v705, %v704
    %722 = vmatprep.subr.bf16.mxu0 0
    %723 = vmatpush1.bf16.msra.mxu0 %v706
    %724 = vmatprep.subr.bf16.mxu0 0
    %725 = vmatpush1.bf16.msra.mxu0 %v707
    %726 = vmatprep.subr.bf16.mxu0 0
    %727 = vmatpush1.bf16.msra.mxu0 %v708
    %728 = vmatprep.subr.bf16.mxu0 0
    %729 = vmatpush1.bf16.msra.mxu0 %v709
    %730 = vmatprep.subr.bf16.mxu0 0
    %731 = vmatpush1.bf16.msra.mxu0 %v710
    %732 = vmatprep.subr.bf16.mxu0 0
    %733 = vmatpush1.bf16.msra.mxu0 %v711
    %734 = vmatprep.subr.bf16.mxu0 0
    %735 = vmatpush1.bf16.msra.mxu0 %v712
    %736 = vmatprep.subr.bf16.mxu0 0
    %737 = vmatpush1.bf16.msra.mxu0 %v713
    %738 = vmatprep.subr.bf16.mxu0 0
    %739 = vmatpush1.bf16.msra.mxu0 0
    %740 = vmatprep.subr.bf16.mxu0 0
    %741 = vmatpush1.bf16.msra.mxu0 0
    %742 = vmatprep.subr.bf16.mxu0 0
    %743 = vmatpush1.bf16.msra.mxu0 0
    %744 = vmatprep.subr.bf16.mxu0 0
    %745 = vmatpush1.bf16.msra.mxu0 0
    %746 = vmatprep.subr.bf16.mxu0 0
    %747 = vmatpush1.bf16.msra.mxu0 0
    %748 = vmatprep.subr.bf16.mxu0 0
    %749 = vmatpush1.bf16.msra.mxu0 0
    %750 = vmatprep.subr.bf16.mxu0 0
    %751 = vmatpush1.bf16.msra.mxu0 0
    %752 = vmatprep.subr.bf16.mxu0 0
    %753 = vmatpush1.bf16.msra.mxu0 0
    %754 = vmatprep.mubr.bf16.mxu0 0
    %755 = vmatmul.mubr.bf16.gmra.mrb[0].mxu0 %v650
    %v756 = vpop.f32.mrb[0].mxu0
    %v757 = vadd.f32 %v672, %v756
    %v758 = vpop.f32.mrb[0].mxu0
    %v759 = vpop.f32.mrb[0].mxu0
    %v760 = vpop.f32.mrb[0].mxu0
    %761 = vdwg.mxu0
    %v762 = vmax.f32 %v757, 0.0
    %v763 = vadd.f32 %v762, %v649
    %v764 = vpack.c.bf16 %v763, %v763
    %s765 = scalar_lea.vmem [#allocation5], 64
    %v766 = vld [vmem:[%s765] sm:$0xf]
    %v767 = vld [vmem:[%s765 + $0x4] sm:$0xf]
    %v768 = vld [vmem:[%s765 + $0x8] sm:$0xf]
    %v769 = vld [vmem:[%s765 + $0xc] sm:$0xf]
    %v770 = vld [vmem:[%s765 + $0x10] sm:$0xf]
    %v771 = vld [vmem:[%s765 + $0x14] sm:$0xf]
    %v772 = vld [vmem:[%s765 + $0x18] sm:$0xf]
    %v773 = vld [vmem:[%s765 + $0x1c] sm:$0xf]
    %v774 = vld [vmem:[%s765 + $0x20] sm:$0xf]
    %v775 = vld [vmem:[%s765 + $0x24] sm:$0xf]
    %v776 = vld [vmem:[%s765 + $0x28] sm:$0xf]
    %v777 = vld [vmem:[%s765 + $0x2c] sm:$0xf]
    %v778 = vld [vmem:[%s765 + $0x30] sm:$0xf]
    %v779 = vld [vmem:[%s765 + $0x34] sm:$0xf]
    %v780 = vld [vmem:[%s765 + $0x38] sm:$0xf]
    %v781 = vld [vmem:[%s765 + $0x3c] sm:$0xf]
    %s782 = scalar_lea.vmem %s4, 1
    %v783 = vld [vmem:[%s782] sm:$0x1]
    %v785 = vlaneseq
    %v786 = vshrl.u32 %v785, 7
    %v787 = vsub.s32 0, %v786
    %v788 = vrot.slane %v783, %v787
    %v806 = vunpack.c.l.b16 %v766
    %v807 = vunpack.c.l.b16 %v767
    %v808 = vunpack.c.l.b16 %v768
    %v809 = vunpack.c.l.b16 %v769
    %v810 = vunpack.c.l.b16 %v770
    %v811 = vunpack.c.l.b16 %v771
    %v812 = vunpack.c.l.b16 %v772
    %v813 = vunpack.c.l.b16 %v773
    %v814 = vunpack.c.l.b16 %v774
    %v815 = vunpack.c.l.b16 %v775
    %v816 = vunpack.c.l.b16 %v776
    %v817 = vunpack.c.l.b16 %v777
    %v818 = vunpack.c.l.b16 %v778
    %v819 = vunpack.c.l.b16 %v779
    %v820 = vunpack.c.l.b16 %v780
    %v821 = vunpack.c.l.b16 %v781
    %v822 = vpack.c.b16 %v807, %v806
    %v823 = vpack.c.b16 %v809, %v808
    %v824 = vpack.c.b16 %v811, %v810
    %v825 = vpack.c.b16 %v813, %v812
    %v826 = vpack.c.b16 %v815, %v814
    %v827 = vpack.c.b16 %v817, %v816
    %v828 = vpack.c.b16 %v819, %v818
    %v829 = vpack.c.b16 %v821, %v820
    %838 = vmatprep.subr.bf16.mxu0 0
    %839 = vmatpush1.bf16.msra.mxu0 %v822
    %840 = vmatprep.subr.bf16.mxu0 0
    %841 = vmatpush1.bf16.msra.mxu0 %v823
    %842 = vmatprep.subr.bf16.mxu0 0
    %843 = vmatpush1.bf16.msra.mxu0 %v824
    %844 = vmatprep.subr.bf16.mxu0 0
    %845 = vmatpush1.bf16.msra.mxu0 %v825
    %846 = vmatprep.subr.bf16.mxu0 0
    %847 = vmatpush1.bf16.msra.mxu0 %v826
    %848 = vmatprep.subr.bf16.mxu0 0
    %849 = vmatpush1.bf16.msra.mxu0 %v827
    %850 = vmatprep.subr.bf16.mxu0 0
    %851 = vmatpush1.bf16.msra.mxu0 %v828
    %852 = vmatprep.subr.bf16.mxu0 0
    %853 = vmatpush1.bf16.msra.mxu0 %v829
    %854 = vmatprep.subr.bf16.mxu0 0
    %855 = vmatpush1.bf16.msra.mxu0 0
    %856 = vmatprep.subr.bf16.mxu0 0
    %857 = vmatpush1.bf16.msra.mxu0 0
    %858 = vmatprep.subr.bf16.mxu0 0
    %859 = vmatpush1.bf16.msra.mxu0 0
    %860 = vmatprep.subr.bf16.mxu0 0
    %861 = vmatpush1.bf16.msra.mxu0 0
    %862 = vmatprep.subr.bf16.mxu0 0
    %863 = vmatpush1.bf16.msra.mxu0 0
    %864 = vmatprep.subr.bf16.mxu0 0
    %865 = vmatpush1.bf16.msra.mxu0 0
    %866 = vmatprep.subr.bf16.mxu0 0
    %867 = vmatpush1.bf16.msra.mxu0 0
    %868 = vmatprep.subr.bf16.mxu0 0
    %869 = vmatpush1.bf16.msra.mxu0 0
    %870 = vmatprep.mubr.bf16.mxu0 0
    %871 = vmatmul.mubr.bf16.gmra.mrb[0].mxu0 %v764
    %v872 = vpop.f32.mrb[0].mxu0
    %v873 = vadd.f32 %v788, %v872
    %v874 = vpop.f32.mrb[0].mxu0
    %v875 = vpop.f32.mrb[0].mxu0
    %v876 = vpop.f32.mrb[0].mxu0
    %877 = vdwg.mxu0
    %v878 = vmax.f32 %v873, 0.0
    %v879 = vadd.f32 %v878, %v763
    %v880 = vpack.c.bf16 %v879, %v879
    %s881 = scalar_lea.vmem [#allocation5], 128
    %v882 = vld [vmem:[%s881] sm:$0xf]
    %v883 = vld [vmem:[%s881 + $0x4] sm:$0xf]
    %v884 = vld [vmem:[%s881 + $0x8] sm:$0xf]
    %v885 = vld [vmem:[%s881 + $0xc] sm:$0xf]
    %v886 = vld [vmem:[%s881 + $0x10] sm:$0xf]
    %v887 = vld [vmem:[%s881 + $0x14] sm:$0xf]
    %v888 = vld [vmem:[%s881 + $0x18] sm:$0xf]
    %v889 = vld [vmem:[%s881 + $0x1c] sm:$0xf]
    %v890 = vld [vmem:[%s881 + $0x20] sm:$0xf]
    %v891 = vld [vmem:[%s881 + $0x24] sm:$0xf]
    %v892 = vld [vmem:[%s881 + $0x28] sm:$0xf]
    %v893 = vld [vmem:[%s881 + $0x2c] sm:$0xf]
    %v894 = vld [vmem:[%s881 + $0x30] sm:$0xf]
    %v895 = vld [vmem:[%s881 + $0x34] sm:$0xf]
    %v896 = vld [vmem:[%s881 + $0x38] sm:$0xf]
    %v897 = vld [vmem:[%s881 + $0x3c] sm:$0xf]
    %s898 = scalar_lea.vmem %s4, 2
    %v899 = vld [vmem:[%s898] sm:$0x1]
    %v901 = vlaneseq
    %v902 = vshrl.u32 %v901, 7
    %v903 = vsub.s32 0, %v902
    %v904 = vrot.slane %v899, %v903
    %v922 = vunpack.c.l.b16 %v882
    %v923 = vunpack.c.l.b16 %v883
    %v924 = vunpack.c.l.b16 %v884
    %v925 = vunpack.c.l.b16 %v885
    %v926 = vunpack.c.l.b16 %v886
    %v927 = vunpack.c.l.b16 %v887
    %v928 = vunpack.c.l.b16 %v888
    %v929 = vunpack.c.l.b16 %v889
    %v930 = vunpack.c.l.b16 %v890
    %v931 = vunpack.c.l.b16 %v891
    %v932 = vunpack.c.l.b16 %v892
    %v933 = vunpack.c.l.b16 %v893
    %v934 = vunpack.c.l.b16 %v894
    %v935 = vunpack.c.l.b16 %v895
    %v936 = vunpack.c.l.b16 %v896
    %v937 = vunpack.c.l.b16 %v897
    %v938 = vpack.c.b16 %v923, %v922
    %v939 = vpack.c.b16 %v925, %v924
    %v940 = vpack.c.b16 %v927, %v926
    %v941 = vpack.c.b16 %v929, %v928
    %v942 = vpack.c.b16 %v931, %v930
    %v943 = vpack.c.b16 %v933, %v932
    %v944 = vpack.c.b16 %v935, %v934
    %v945 = vpack.c.b16 %v937, %v936
    %954 = vmatprep.subr.bf16.mxu0 0
    %955 = vmatpush1.bf16.msra.mxu0 %v938
    %956 = vmatprep.subr.bf16.mxu0 0
    %957 = vmatpush1.bf16.msra.mxu0 %v939
    %958 = vmatprep.subr.bf16.mxu0 0
    %959 = vmatpush1.bf16.msra.mxu0 %v940
    %960 = vmatprep.subr.bf16.mxu0 0
    %961 = vmatpush1.bf16.msra.mxu0 %v941
    %962 = vmatprep.subr.bf16.mxu0 0
    %963 = vmatpush1.bf16.msra.mxu0 %v942
    %964 = vmatprep.subr.bf16.mxu0 0
    %965 = vmatpush1.bf16.msra.mxu0 %v943
    %966 = vmatprep.subr.bf16.mxu0 0
    %967 = vmatpush1.bf16.msra.mxu0 %v944
    %968 = vmatprep.subr.bf16.mxu0 0
    %969 = vmatpush1.bf16.msra.mxu0 %v945
    %970 = vmatprep.subr.bf16.mxu0 0
    %971 = vmatpush1.bf16.msra.mxu0 0
    %972 = vmatprep.subr.bf16.mxu0 0
    %973 = vmatpush1.bf16.msra.mxu0 0
    %974 = vmatprep.subr.bf16.mxu0 0
    %975 = vmatpush1.bf16.msra.mxu0 0
    %976 = vmatprep.subr.bf16.mxu0 0
    %977 = vmatpush1.bf16.msra.mxu0 0
    %978 = vmatprep.subr.bf16.mxu0 0
    %979 = vmatpush1.bf16.msra.mxu0 0
    %980 = vmatprep.subr.bf16.mxu0 0
    %981 = vmatpush1.bf16.msra.mxu0 0
    %982 = vmatprep.subr.bf16.mxu0 0
    %983 = vmatpush1.bf16.msra.mxu0 0
    %984 = vmatprep.subr.bf16.mxu0 0
    %985 = vmatpush1.bf16.msra.mxu0 0
    %986 = vmatprep.mubr.bf16.mxu0 0
    %987 = vmatmul.mubr.bf16.gmra.mrb[0].mxu0 %v880
    %v988 = vpop.f32.mrb[0].mxu0
    %v989 = vadd.f32 %v904, %v988
    %v990 = vpop.f32.mrb[0].mxu0
    %v991 = vpop.f32.mrb[0].mxu0
    %v992 = vpop.f32.mrb[0].mxu0
    %993 = vdwg.mxu0
    %v994 = vmax.f32 %v989, 0.0
    %v995 = vadd.f32 %v994, %v879
    %v996 = vpack.c.bf16 %v995, %v995
    %s997 = scalar_lea.vmem [#allocation5], 192
    %v998 = vld [vmem:[%s997] sm:$0xf]
    %v999 = vld [vmem:[%s997 + $0x4] sm:$0xf]
    %v1000 = vld [vmem:[%s997 + $0x8] sm:$0xf]
    %v1001 = vld [vmem:[%s997 + $0xc] sm:$0xf]
    %v1002 = vld [vmem:[%s997 + $0x10] sm:$0xf]
    %v1003 = vld [vmem:[%s997 + $0x14] sm:$0xf]
    %v1004 = vld [vmem:[%s997 + $0x18] sm:$0xf]
    %v1005 = vld [vmem:[%s997 + $0x1c] sm:$0xf]
    %v1006 = vld [vmem:[%s997 + $0x20] sm:$0xf]
    %v1007 = vld [vmem:[%s997 + $0x24] sm:$0xf]
    %v1008 = vld [vmem:[%s997 + $0x28] sm:$0xf]
    %v1009 = vld [vmem:[%s997 + $0x2c] sm:$0xf]
    %v1010 = vld [vmem:[%s997 + $0x30] sm:$0xf]
    %v1011 = vld [vmem:[%s997 + $0x34] sm:$0xf]
    %v1012 = vld [vmem:[%s997 + $0x38] sm:$0xf]
    %v1013 = vld [vmem:[%s997 + $0x3c] sm:$0xf]
    %s1014 = scalar_lea.vmem %s4, 3
    %v1015 = vld [vmem:[%s1014] sm:$0x1]
    %v1017 = vlaneseq
    %v1018 = vshrl.u32 %v1017, 7
    %v1019 = vsub.s32 0, %v1018
    %v1020 = vrot.slane %v1015, %v1019
    %v1038 = vunpack.c.l.b16 %v998
    %v1039 = vunpack.c.l.b16 %v999
    %v1040 = vunpack.c.l.b16 %v1000
    %v1041 = vunpack.c.l.b16 %v1001
    %v1042 = vunpack.c.l.b16 %v1002
    %v1043 = vunpack.c.l.b16 %v1003
    %v1044 = vunpack.c.l.b16 %v1004
    %v1045 = vunpack.c.l.b16 %v1005
    %v1046 = vunpack.c.l.b16 %v1006
    %v1047 = vunpack.c.l.b16 %v1007
    %v1048 = vunpack.c.l.b16 %v1008
    %v1049 = vunpack.c.l.b16 %v1009
    %v1050 = vunpack.c.l.b16 %v1010
    %v1051 = vunpack.c.l.b16 %v1011
    %v1052 = vunpack.c.l.b16 %v1012
    %v1053 = vunpack.c.l.b16 %v1013
    %v1054 = vpack.c.b16 %v1039, %v1038
    %v1055 = vpack.c.b16 %v1041, %v1040
    %v1056 = vpack.c.b16 %v1043, %v1042
    %v1057 = vpack.c.b16 %v1045, %v1044
    %v1058 = vpack.c.b16 %v1047, %v1046
    %v1059 = vpack.c.b16 %v1049, %v1048
    %v1060 = vpack.c.b16 %v1051, %v1050
    %v1061 = vpack.c.b16 %v1053, %v1052
    %1070 = vmatprep.subr.bf16.mxu0 0
    %1071 = vmatpush1.bf16.msra.mxu0 %v1054
    %1072 = vmatprep.subr.bf16.mxu0 0
    %1073 = vmatpush1.bf16.msra.mxu0 %v1055
    %1074 = vmatprep.subr.bf16.mxu0 0
    %1075 = vmatpush1.bf16.msra.mxu0 %v1056
    %1076 = vmatprep.subr.bf16.mxu0 0
    %1077 = vmatpush1.bf16.msra.mxu0 %v1057
    %1078 = vmatprep.subr.bf16.mxu0 0
    %1079 = vmatpush1.bf16.msra.mxu0 %v1058
    %1080 = vmatprep.subr.bf16.mxu0 0
    %1081 = vmatpush1.bf16.msra.mxu0 %v1059
    %1082 = vmatprep.subr.bf16.mxu0 0
    %1083 = vmatpush1.bf16.msra.mxu0 %v1060
    %1084 = vmatprep.subr.bf16.mxu0 0
    %1085 = vmatpush1.bf16.msra.mxu0 %v1061
    %1086 = vmatprep.subr.bf16.mxu0 0
    %1087 = vmatpush1.bf16.msra.mxu0 0
    %1088 = vmatprep.subr.bf16.mxu0 0
    %1089 = vmatpush1.bf16.msra.mxu0 0
    %1090 = vmatprep.subr.bf16.mxu0 0
    %1091 = vmatpush1.bf16.msra.mxu0 0
    %1092 = vmatprep.subr.bf16.mxu0 0
    %1093 = vmatpush1.bf16.msra.mxu0 0
    %1094 = vmatprep.subr.bf16.mxu0 0
    %1095 = vmatpush1.bf16.msra.mxu0 0
    %1096 = vmatprep.subr.bf16.mxu0 0
    %1097 = vmatpush1.bf16.msra.mxu0 0
    %1098 = vmatprep.subr.bf16.mxu0 0
    %1099 = vmatpush1.bf16.msra.mxu0 0
    %1100 = vmatprep.subr.bf16.mxu0 0
    %1101 = vmatpush1.bf16.msra.mxu0 0
    %1102 = vmatprep.mubr.bf16.mxu0 0
    %1103 = vmatmul.mubr.bf16.gmra.mrb[0].mxu0 %v996
    %v1104 = vpop.f32.mrb[0].mxu0
    %v1105 = vadd.f32 %v1020, %v1104
    %v1106 = vpop.f32.mrb[0].mxu0
    %v1107 = vpop.f32.mrb[0].mxu0
    %v1108 = vpop.f32.mrb[0].mxu0
    %1109 = vdwg.mxu0
    %v1110 = vmax.f32 %v1105, 0.0
    %v1111 = vadd.f32 %v1110, %v995
    %v1112 = vpack.c.bf16 %v1111, %v1111
    %v1113 = vld [vmem:[%s5] sm:$0xf]
    %v1114 = vld [vmem:[%s5 + $0x4] sm:$0xf]
    %v1115 = vld [vmem:[%s5 + $0x8] sm:$0xf]
    %v1116 = vld [vmem:[%s5 + $0xc] sm:$0xf]
    %v1117 = vld [vmem:[%s5 + $0x10] sm:$0xf]
    %v1118 = vld [vmem:[%s5 + $0x14] sm:$0xf]
    %v1119 = vld [vmem:[%s5 + $0x18] sm:$0xf]
    %v1120 = vld [vmem:[%s5 + $0x1c] sm:$0xf]
    %v1121 = vld [vmem:[%s5 + $0x20] sm:$0xf]
    %v1122 = vld [vmem:[%s5 + $0x24] sm:$0xf]
    %v1123 = vld [vmem:[%s5 + $0x28] sm:$0xf]
    %v1124 = vld [vmem:[%s5 + $0x2c] sm:$0xf]
    %v1125 = vld [vmem:[%s5 + $0x30] sm:$0xf]
    %v1126 = vld [vmem:[%s5 + $0x34] sm:$0xf]
    %v1127 = vld [vmem:[%s5 + $0x38] sm:$0xf]
    %v1128 = vld [vmem:[%s5 + $0x3c] sm:$0xf]
    %v1129 = vld [vmem:[%s6] sm:$0x1]
    %v1131 = vlaneseq
    %v1132 = vshrl.u32 %v1131, 7
    %v1133 = vsub.s32 0, %v1132
    %v1134 = vrot.slane %v1129, %v1133
    %v1152 = vunpack.c.l.b16 %v1113
    %v1153 = vunpack.c.l.b16 %v1114
    %v1154 = vunpack.c.l.b16 %v1115
    %v1155 = vunpack.c.l.b16 %v1116
    %v1156 = vunpack.c.l.b16 %v1117
    %v1157 = vunpack.c.l.b16 %v1118
    %v1158 = vunpack.c.l.b16 %v1119
    %v1159 = vunpack.c.l.b16 %v1120
    %v1160 = vunpack.c.l.b16 %v1121
    %v1161 = vunpack.c.l.b16 %v1122
    %v1162 = vunpack.c.l.b16 %v1123
    %v1163 = vunpack.c.l.b16 %v1124
    %v1164 = vunpack.c.l.b16 %v1125
    %v1165 = vunpack.c.l.b16 %v1126
    %v1166 = vunpack.c.l.b16 %v1127
    %v1167 = vunpack.c.l.b16 %v1128
    %v1168 = vpack.c.b16 %v1153, %v1152
    %v1169 = vpack.c.b16 %v1155, %v1154
    %v1170 = vpack.c.b16 %v1157, %v1156
    %v1171 = vpack.c.b16 %v1159, %v1158
    %v1172 = vpack.c.b16 %v1161, %v1160
    %v1173 = vpack.c.b16 %v1163, %v1162
    %v1174 = vpack.c.b16 %v1165, %v1164
    %v1175 = vpack.c.b16 %v1167, %v1166
    %1184 = vmatprep.subr.bf16.mxu0 0
    %1185 = vmatpush1.bf16.msra.mxu0 %v1168
    %1186 = vmatprep.subr.bf16.mxu0 0
    %1187 = vmatpush1.bf16.msra.mxu0 %v1169
    %1188 = vmatprep.subr.bf16.mxu0 0
    %1189 = vmatpush1.bf16.msra.mxu0 %v1170
    %1190 = vmatprep.subr.bf16.mxu0 0
    %1191 = vmatpush1.bf16.msra.mxu0 %v1171
    %1192 = vmatprep.subr.bf16.mxu0 0
    %1193 = vmatpush1.bf16.msra.mxu0 %v1172
    %1194 = vmatprep.subr.bf16.mxu0 0
    %1195 = vmatpush1.bf16.msra.mxu0 %v1173
    %1196 = vmatprep.subr.bf16.mxu0 0
    %1197 = vmatpush1.bf16.msra.mxu0 %v1174
    %1198 = vmatprep.subr.bf16.mxu0 0
    %1199 = vmatpush1.bf16.msra.mxu0 %v1175
    %1200 = vmatprep.subr.bf16.mxu0 0
    %1201 = vmatpush1.bf16.msra.mxu0 0
    %1202 = vmatprep.subr.bf16.mxu0 0
    %1203 = vmatpush1.bf16.msra.mxu0 0
    %1204 = vmatprep.subr.bf16.mxu0 0
    %1205 = vmatpush1.bf16.msra.mxu0 0
    %1206 = vmatprep.subr.bf16.mxu0 0
    %1207 = vmatpush1.bf16.msra.mxu0 0
    %1208 = vmatprep.subr.bf16.mxu0 0
    %1209 = vmatpush1.bf16.msra.mxu0 0
    %1210 = vmatprep.subr.bf16.mxu0 0
    %1211 = vmatpush1.bf16.msra.mxu0 0
    %1212 = vmatprep.subr.bf16.mxu0 0
    %1213 = vmatpush1.bf16.msra.mxu0 0
    %1214 = vmatprep.subr.bf16.mxu0 0
    %1215 = vmatpush1.bf16.msra.mxu0 0
    %1216 = vmatprep.mubr.bf16.mxu0 0
    %1217 = vmatmul.mubr.bf16.gmra.mrb[0].mxu0 %v1112
    %v1218 = vpop.f32.mrb[0].mxu0
    %v1219 = vadd.f32 %v1134, %v1218
    %v1220 = vpop.f32.mrb[0].mxu0
    %v1221 = vpop.f32.mrb[0].mxu0
    %v1222 = vpop.f32.mrb[0].mxu0
    %1223 = vdwg.mxu0
    %vm1224 = vcmask 64512
    %1225 = vst.msk [vmem:[#allocation7] sm:$0xff] %vm1224, %v1219
    // Predicated region
    $region38: #{tpu_custom_call.1} parent=1 // pred_check
      _
    $region39: #{tpu_custom_call.1} parent=1 // pred_check_branch
      %1227 = sbr.rel (0) target = $region41
    $region40: #{tpu_custom_call.1} parent=1 // pred_region
      %s1229 = ssub.s32 128, 32
      %1230 = vsyncadd [#allocation4], %s1229
      %s1231 = sshll.u32 [#allocation7], 4
      %s1232 = int_to_ptr.vmem [resolvable:$true] %s1231
      %1237 = dma.vmem_to_hbm [thread:$0]  %s1232, 32, %s7, [#allocation4], 32, 32, 2
    $region41: #{tpu_custom_call.1} parent=1 // pred_fallthru
      _
    // Predicated region
    $region42: #{tpu_custom_call.1} parent=1 // pred_check
      _
    $region43: #{tpu_custom_call.1} parent=1 // pred_check_branch
      %1239 = sbr.rel (0) target = $region45
    $region44: #{tpu_custom_call.1} parent=1 // pred_region
      %1240 = dma.done [#allocation4], 128
    $region45: #{tpu_custom_call.1} parent=1 // pred_fallthru
      _
    %1241 = vsyncpa [#allocation3], 1
    %1242 = vsyncpa [#allocation6], 1
    %1243 = vsyncpa [#allocation4], 1

</llo_original>
